<compile_context>
chip_gen: v7x
topology: tpu7x:2x2x1
jax: 0.10.0
libtpu: 0.0.40
codegen_flags: <defaults>
</compile_context>

<pallas_src>
import functools
import math

import jax
import jax.numpy as jnp
from jax.experimental import pallas as pl
from jax.experimental.pallas import tpu as pltpu

LANE = 128  # TPU lane width; hidden dims are padded to a multiple of this.


# --------------------------------------------------------------------------- #
# Kernel
# --------------------------------------------------------------------------- #
def _actor_mlp_kernel(x_ref, w1_ref, b1_ref, w2_ref, b2_ref, w3_ref, b3_ref,
                      o_ref, *, action_limit):
    # Three MXU matmuls + VPU bias/ReLU + EUP tanh; all operands VMEM-resident.
    # Matmul inputs may be bf16; accumulation and the epilogue stay in f32.
    x = x_ref[...].astype(w1_ref.dtype)                 # cheap in-VMEM cast
    h = jnp.dot(x, w1_ref[...], preferred_element_type=jnp.float32) + b1_ref[...]
    h = jnp.maximum(h, 0.0)                             # ReLU (f32)
    h = jnp.dot(h.astype(w2_ref.dtype), w2_ref[...],
                preferred_element_type=jnp.float32) + b2_ref[...]
    h = jnp.maximum(h, 0.0)                             # ReLU (f32)
    y = jnp.dot(h.astype(w3_ref.dtype), w3_ref[...],
                preferred_element_type=jnp.float32) + b3_ref[...]
    o_ref[...] = (jnp.tanh(y) * action_limit).astype(o_ref.dtype)


# --------------------------------------------------------------------------- #
# Helpers
# --------------------------------------------------------------------------- #
def _round_up(x, m):
    return ((x + m - 1) // m) * m


def _pad2d(a, rows, cols):
    r, c = a.shape
    if r == rows and c == cols:
        return a
    return jnp.pad(a, ((0, rows - r), (0, cols - c)))


@functools.lru_cache(maxsize=None)
def _num_tensorcores():
    """2 for v7x-class devices (2 TCs per chip), else 1 (v5e/v6e)."""
    try:
        kind = jax.devices()[0].device_kind.lower()
        if "v7" in kind:
            return 2
    except Exception:  # pragma: no cover - defensive
        pass
    return 1


def _choose_batch_tile(B, num_cores):
    """Single tile (<=1024 rows) on 1-TC chips; 2-way split only on 2-TC
    chips when the batch is big enough to amortize the extra grid step."""
    Bp8 = _round_up(B, 8)
    if num_cores >= 2 and Bp8 >= 64:
        tile = _round_up(math.ceil(Bp8 / 2), 8)
        return min(tile, 1024)
    return min(Bp8, 1024)


# --------------------------------------------------------------------------- #
# Parameter preparation (do this ONCE, not per forward call)
# --------------------------------------------------------------------------- #
def prepare_actor_params(params, *, use_bf16=True):
    """Pad hidden dims to the 128-lane grid and cast matmul weights once.
    w3/b3 are kept un-padded in the output (action) dimension so the kernel
    writes only the real action lanes."""
    w1, b1 = params["w1"], params["b1"]
    w2, b2 = params["w2"], params["b2"]
    w3, b3 = params["w3"], params["b3"]
    state_dim, h0 = w1.shape
    h1 = w2.shape[1]
    action_dim = w3.shape[1]
    H0p, H1p = _round_up(h0, LANE), _round_up(h1, LANE)
    mm_dtype = jnp.bfloat16 if use_bf16 else jnp.float32
    return {
        "w1": _pad2d(w1, state_dim, H0p).astype(mm_dtype),
        "b1": _pad2d(b1.reshape(1, -1), 1, H0p).astype(jnp.float32),
        "w2": _pad2d(w2, H0p, H1p).astype(mm_dtype),
        "b2": _pad2d(b2.reshape(1, -1), 1, H1p).astype(jnp.float32),
        "w3": _pad2d(w3, H1p, action_dim).astype(mm_dtype),
        "b3": b3.reshape(1, -1).astype(jnp.float32),
        "_meta": (int(state_dim), int(H0p), int(H1p), int(action_dim),
                  jnp.dtype(mm_dtype).name),
    }


# --------------------------------------------------------------------------- #
# pallas_call builder (cached per shape / dtype / action_limit)
# --------------------------------------------------------------------------- #
@functools.lru_cache(maxsize=None)
def _build_actor_call(Bp, batch_tile, state_dim, H0p, H1p, action_dim,
                      mm_dtype_name, action_limit):
    grid = (Bp // batch_tile,)
    kernel = functools.partial(_actor_mlp_kernel, action_limit=action_limit)
    elem = jnp.dtype(mm_dtype_name).itemsize

    cost = pl.CostEstimate(
        flops=2 * Bp * (state_dim * H0p + H0p * H1p + H1p * action_dim),
        transcendentals=Bp * action_dim,
        bytes_accessed=(Bp * state_dim * 4                              # x (f32)
                        + (state_dim * H0p + H0p * H1p + H1p * action_dim) * elem
                        + (H0p + H1p + action_dim) * 4                  # biases
                        + Bp * action_dim * 4),                         # output
    )

    return pl.pallas_call(
        kernel,
        out_shape=jax.ShapeDtypeStruct((Bp, action_dim), jnp.float32),
        grid_spec=pltpu.PrefetchScalarGridSpec(
            num_scalar_prefetch=0,
            grid=grid,
            in_specs=[
                # x streamed un-padded in the lane dim (full-dim block is legal)
                pl.BlockSpec((batch_tile, state_dim), lambda i: (i, 0)),
                # weights/biases: constant index_map -> resident across the grid
                pl.BlockSpec((state_dim, H0p), lambda i: (0, 0)),
                pl.BlockSpec((1, H0p), lambda i: (0, 0)),
                pl.BlockSpec((H0p, H1p), lambda i: (0, 0)),
                pl.BlockSpec((1, H1p), lambda i: (0, 0)),
                pl.BlockSpec((H1p, action_dim), lambda i: (0, 0)),
                pl.BlockSpec((1, action_dim), lambda i: (0, 0)),
            ],
            # narrow (action_dim-wide) output block: ~16x less store traffic
            out_specs=pl.BlockSpec((batch_tile, action_dim), lambda i: (i, 0)),
        ),
        compiler_params=pltpu.CompilerParams(
            dimension_semantics=("parallel",)),
        cost_estimate=cost,
    )


# --------------------------------------------------------------------------- #
# Public forward
# --------------------------------------------------------------------------- #
def actor_forward(state, params, *, action_limit=1.0, batch_tile=None,
                  use_bf16=True):
    """state: (B, state_dim) float32.
    params: either raw params (w{1,2,3} as (fan_in, fan_out), b{1,2,3}) or the
    output of `prepare_actor_params` (preferred: prepare once, reuse)."""
    if "_meta" not in params:
        # TODO(synk): in a real training loop keep the prepared params cached
        # (re-prepare only after parameter updates) so no per-call pad/cast.
        params = prepare_actor_params(params, use_bf16=use_bf16)
    state_dim, H0p, H1p, action_dim, mm_name = params["_meta"]

    B, sd = state.shape
    assert sd == state_dim, f"state_dim mismatch: {sd} vs {state_dim}"

    if batch_tile is None:
        batch_tile = _choose_batch_tile(B, _num_tensorcores())
    batch_tile = max(8, _round_up(int(batch_tile), 8))
    Bp = _round_up(B, batch_tile)

    x = state.astype(jnp.float32)
    if Bp != B:
        x = jnp.pad(x, ((0, Bp - B), (0, 0)))

    call = _build_actor_call(Bp, batch_tile, state_dim, H0p, H1p, action_dim,
                             mm_name, float(action_limit))
    out = call(x, params["w1"], params["b1"], params["w2"], params["b2"],
               params["w3"], params["b3"])
    return out[:B] if Bp != B else out


# --------------------------------------------------------------------------- #
# Init (mirrors Actor.__init__ + Actor.reset()) and pure-JAX reference
# --------------------------------------------------------------------------- #
def init_actor_params(key, state_dim, hidden_sizes, action_dim):
    """layer 0 weight ~ U(-1/sqrt(state_dim), 1/sqrt(state_dim)); subsequent
    Linear weights ~ U(-0.003, 0.003); biases keep PyTorch-default
    U(-1/sqrt(fan_in), 1/sqrt(fan_in)).  Weights stored as (fan_in, fan_out)."""
    h0, h1 = hidden_sizes
    keys = jax.random.split(key, 6)
    lim0 = 1.0 / jnp.sqrt(jnp.float32(state_dim))
    limb1 = 1.0 / jnp.sqrt(jnp.float32(h0))
    limb2 = 1.0 / jnp.sqrt(jnp.float32(h1))
    return {
        "w1": jax.random.uniform(keys[0], (state_dim, h0), jnp.float32, -lim0, lim0),
        "b1": jax.random.uniform(keys[1], (1, h0), jnp.float32, -lim0, lim0),
        "w2": jax.random.uniform(keys[2], (h0, h1), jnp.float32, -0.003, 0.003),
        "b2": jax.random.uniform(keys[3], (1, h1), jnp.float32, -limb1, limb1),
        "w3": jax.random.uniform(keys[4], (h1, action_dim), jnp.float32, -0.003, 0.003),
        "b3": jax.random.uniform(keys[5], (1, action_dim), jnp.float32, -limb2, limb2),
    }


def actor_forward_ref(state, params, action_limit=1.0):
    h = jnp.maximum(state @ params["w1"] + params["b1"], 0.0)
    h = jnp.maximum(h @ params["w2"] + params["b2"], 0.0)
    return jnp.tanh(h @ params["w3"] + params["b3"]) * action_limit


if __name__ == "__main__":
    state_dim = 16
    hidden_sizes = [32, 32]
    action_dim = 8
    action_limit = 1.0

    key = jax.random.PRNGKey(0)
    k_params, k_state1, k_state2 = jax.random.split(key, 3)
    params = init_actor_params(k_params, state_dim, hidden_sizes, action_dim)

    # Prepare (pad + cast) the weights ONCE for each matmul dtype and reuse.
    prepared_f32 = prepare_actor_params(params, use_bf16=False)
    prepared_bf16 = prepare_actor_params(params, use_bf16=True)

    # --- case 1: small batch, f32 path (tight tolerance) --------------------
    state = jax.random.normal(k_state1, (8, state_dim), jnp.float32)
    out_f32 = jax.block_until_ready(
        actor_forward(state, prepared_f32, action_limit=action_limit))
    ref = actor_forward_ref(state, params, action_limit)
    assert out_f32.shape == (8, action_dim)
    assert jnp.allclose(out_f32, ref, atol=1e-5, rtol=1e-5)

    # --- case 2: same batch, bf16 matmul path (looser tolerance) ------------
    out_bf16 = jax.block_until_ready(
        actor_forward(state, prepared_bf16, action_limit=action_limit))
    assert jnp.allclose(out_bf16, ref, atol=2e-2, rtol=2e-2)

    # --- case 3: non-multiple batch exercises batch padding -----------------
    state2 = jax.random.normal(k_state2, (20, state_dim), jnp.float32)
    out2 = jax.block_until_ready(
        actor_forward(state2, prepared_f32, action_limit=action_limit))
    ref2 = actor_forward_ref(state2, params, action_limit)
    assert out2.shape == (20, action_dim)
    assert jnp.allclose(out2, ref2, atol=1e-5, rtol=1e-5)

    # --- case 4: raw-params convenience path (pads/casts on the fly) --------
    out3 = jax.block_until_ready(
        actor_forward(state, params, action_limit=action_limit, use_bf16=False))
    assert jnp.allclose(out3, ref, atol=1e-5, rtol=1e-5)

    print("KERNEL_OK")
</pallas_src>

<mosaic_0001>
module attributes {stable_mosaic.version = 11 : i64} {
  func.func @_actor_mlp_kernel(%arg0: i32, %arg1: memref<8x16xf32, #tpu.memory_space<vmem>>, %arg2: memref<16x128xf32, #tpu.memory_space<vmem>>, %arg3: memref<1x128xf32, #tpu.memory_space<vmem>>, %arg4: memref<128x128xf32, #tpu.memory_space<vmem>>, %arg5: memref<1x128xf32, #tpu.memory_space<vmem>>, %arg6: memref<128x8xf32, #tpu.memory_space<vmem>>, %arg7: memref<1x8xf32, #tpu.memory_space<vmem>>, %arg8: memref<8x8xf32, #tpu.memory_space<vmem>>) attributes {dimension_semantics = [#tpu.dimension_semantics<parallel>], iteration_bounds = array<i64: 1>, scalar_prefetch = 0 : i64, scratch_operands = 0 : i64, tpu.core_type = #tpu.core_type<tc>, window_params = [{transform_indices = @transform_0, window_bounds = array<i64: 8, 16>}, {pipeline_mode = #tpu.pipeline_mode<synchronous>, transform_indices = @transform_1, window_bounds = array<i64: 16, 128>}, {pipeline_mode = #tpu.pipeline_mode<synchronous>, transform_indices = @transform_2, window_bounds = array<i64: 1, 128>}, {pipeline_mode = #tpu.pipeline_mode<synchronous>, transform_indices = @transform_3, window_bounds = array<i64: 128, 128>}, {pipeline_mode = #tpu.pipeline_mode<synchronous>, transform_indices = @transform_4, window_bounds = array<i64: 1, 128>}, {pipeline_mode = #tpu.pipeline_mode<synchronous>, transform_indices = @transform_5, window_bounds = array<i64: 128, 8>}, {pipeline_mode = #tpu.pipeline_mode<synchronous>, transform_indices = @transform_6, window_bounds = array<i64: 1, 8>}, {transform_indices = @transform_7, window_bounds = array<i64: 8, 8>}]} {
    %c0 = arith.constant 0 : index
    %c0_0 = arith.constant 0 : index
    %0 = vector.load %arg1[%c0, %c0_0] : memref<8x16xf32, #tpu.memory_space<vmem>>, vector<8x16xf32>
    %c0_1 = arith.constant 0 : index
    %c0_2 = arith.constant 0 : index
    %1 = vector.load %arg2[%c0_1, %c0_2] : memref<16x128xf32, #tpu.memory_space<vmem>>, vector<16x128xf32>
    %cst = arith.constant dense<0.000000e+00> : vector<8x128xf32>
    %2 = tpu.matmul %0, %1, %cst {dimension_numbers = #tpu.dot_dimension_numbers<[1], [0], [0], [1], [0, 0, 1, 1], [], []>} : vector<8x16xf32>, vector<16x128xf32>, vector<8x128xf32> -> vector<8x128xf32>
    %c0_3 = arith.constant 0 : index
    %c0_4 = arith.constant 0 : index
    %3 = vector.load %arg3[%c0_3, %c0_4] : memref<1x128xf32, #tpu.memory_space<vmem>>, vector<1x128xf32>
    %4 = vector.broadcast %3 : vector<1x128xf32> to vector<8x128xf32>
    %5 = arith.addf %2, %4 : vector<8x128xf32>
    %cst_5 = arith.constant 0.000000e+00 : f32
    %6 = vector.broadcast %cst_5 : f32 to vector<8x128xf32>
    %7 = arith.maximumf %5, %6 : vector<8x128xf32>
    %c0_6 = arith.constant 0 : index
    %c0_7 = arith.constant 0 : index
    %8 = vector.load %arg4[%c0_6, %c0_7] : memref<128x128xf32, #tpu.memory_space<vmem>>, vector<128x128xf32>
    %cst_8 = arith.constant dense<0.000000e+00> : vector<8x128xf32>
    %9 = tpu.matmul %7, %8, %cst_8 {dimension_numbers = #tpu.dot_dimension_numbers<[1], [0], [0], [1], [0, 0, 1, 1], [], []>} : vector<8x128xf32>, vector<128x128xf32>, vector<8x128xf32> -> vector<8x128xf32>
    %c0_9 = arith.constant 0 : index
    %c0_10 = arith.constant 0 : index
    %10 = vector.load %arg5[%c0_9, %c0_10] : memref<1x128xf32, #tpu.memory_space<vmem>>, vector<1x128xf32>
    %11 = vector.broadcast %10 : vector<1x128xf32> to vector<8x128xf32>
    %12 = arith.addf %9, %11 : vector<8x128xf32>
    %cst_11 = arith.constant 0.000000e+00 : f32
    %13 = vector.broadcast %cst_11 : f32 to vector<8x128xf32>
    %14 = arith.maximumf %12, %13 : vector<8x128xf32>
    %c0_12 = arith.constant 0 : index
    %c0_13 = arith.constant 0 : index
    %15 = vector.load %arg6[%c0_12, %c0_13] : memref<128x8xf32, #tpu.memory_space<vmem>>, vector<128x8xf32>
    %cst_14 = arith.constant dense<0.000000e+00> : vector<8x8xf32>
    %16 = tpu.matmul %14, %15, %cst_14 {dimension_numbers = #tpu.dot_dimension_numbers<[1], [0], [0], [1], [0, 0, 1, 1], [], []>} : vector<8x128xf32>, vector<128x8xf32>, vector<8x8xf32> -> vector<8x8xf32>
    %c0_15 = arith.constant 0 : index
    %c0_16 = arith.constant 0 : index
    %17 = vector.load %arg7[%c0_15, %c0_16] : memref<1x8xf32, #tpu.memory_space<vmem>>, vector<1x8xf32>
    %18 = vector.broadcast %17 : vector<1x8xf32> to vector<8x8xf32>
    %19 = arith.addf %16, %18 : vector<8x8xf32>
    %20 = math.tanh %19 : vector<8x8xf32>
    %cst_17 = arith.constant 1.000000e+00 : f32
    %21 = vector.broadcast %cst_17 : f32 to vector<8x8xf32>
    %22 = arith.mulf %20, %21 : vector<8x8xf32>
    %c0_18 = arith.constant 0 : index
    %c0_19 = arith.constant 0 : index
    %23 = vector.load %arg8[%c0_18, %c0_19] : memref<8x8xf32, #tpu.memory_space<vmem>>, vector<8x8xf32>
    tpu.vector_store %arg8[%c0_18, %c0_19], %22 {strides = array<i32>} : memref<8x8xf32, #tpu.memory_space<vmem>>, vector<8x8xf32>,
    return
  }
  func.func @transform_0(%arg0: i32) -> (i32, i32) {
    %c0_i32 = arith.constant 0 : i32
    %c0_i32_0 = arith.constant 0 : i32
    return %arg0, %c0_i32 : i32, i32
  }
  func.func @transform_1(%arg0: i32) -> (i32, i32) {
    %c0_i32 = arith.constant 0 : i32
    %c0_i32_0 = arith.constant 0 : i32
    %c0_i32_1 = arith.constant 0 : i32
    return %c0_i32, %c0_i32_0 : i32, i32
  }
  func.func @transform_2(%arg0: i32) -> (i32, i32) {
    %c0_i32 = arith.constant 0 : i32
    %c0_i32_0 = arith.constant 0 : i32
    %c0_i32_1 = arith.constant 0 : i32
    return %c0_i32, %c0_i32_0 : i32, i32
  }
  func.func @transform_3(%arg0: i32) -> (i32, i32) {
    %c0_i32 = arith.constant 0 : i32
    %c0_i32_0 = arith.constant 0 : i32
    %c0_i32_1 = arith.constant 0 : i32
    return %c0_i32, %c0_i32_0 : i32, i32
  }
  func.func @transform_4(%arg0: i32) -> (i32, i32) {
    %c0_i32 = arith.constant 0 : i32
    %c0_i32_0 = arith.constant 0 : i32
    %c0_i32_1 = arith.constant 0 : i32
    return %c0_i32, %c0_i32_0 : i32, i32
  }
  func.func @transform_5(%arg0: i32) -> (i32, i32) {
    %c0_i32 = arith.constant 0 : i32
    %c0_i32_0 = arith.constant 0 : i32
    %c0_i32_1 = arith.constant 0 : i32
    return %c0_i32, %c0_i32_0 : i32, i32
  }
  func.func @transform_6(%arg0: i32) -> (i32, i32) {
    %c0_i32 = arith.constant 0 : i32
    %c0_i32_0 = arith.constant 0 : i32
    %c0_i32_1 = arith.constant 0 : i32
    return %c0_i32, %c0_i32_0 : i32, i32
  }
  func.func @transform_7(%arg0: i32) -> (i32, i32) {
    %c0_i32 = arith.constant 0 : i32
    %c0_i32_0 = arith.constant 0 : i32
    return %arg0, %c0_i32 : i32, i32
  }
}

</mosaic_0001>

<llo_original>
// kernel: tpu_custom_call.1
$region0: #{tpu_custom_call.1}
  #allocation0 [shape = 'u32[]', space=smem, size = 0x4, offset = 0x4, fixed_abs, tag = 'smem constant byte address 0x4 - core index']
  #allocation1 [shape = 'u32[144,128]{1,0:T(1,128)}', space=vmem, size = 0x12000, scoped, tag = 'internal scratch']
  %s0 = inlined_call_operand.hbm [shape: f32[8,16], index: 0, kind: input, shape index: {}]
  %s1 = inlined_call_operand.vmem [shape: f32[16,128], index: 1, kind: input, shape index: {}]
  %s2 = inlined_call_operand.vmem [shape: f32[1,128], index: 2, kind: input, shape index: {}]
  %s3 = inlined_call_operand.vmem [shape: f32[128,128], index: 3, kind: input, shape index: {}]
  %s4 = inlined_call_operand.vmem [shape: f32[1,128], index: 4, kind: input, shape index: {}]
  %s5 = inlined_call_operand.vmem [shape: f32[128,8], index: 5, kind: input, shape index: {}]
  %s6 = inlined_call_operand.vmem [shape: f32[1,8], index: 6, kind: input, shape index: {}]
  %s7 = inlined_call_operand.hbm [shape: f32[8,8], index: 7, kind: output, shape index: {}]
  %s8 = sld [smem:[#allocation0]]
  $region42: #{tpu_custom_call.1} parent=0
    _
  %s10 = ssub.s32 1, %s8
  %s11 = scalar_select 0, %s10, %s8
  $region1: #{tpu_custom_call.1} parent=0
    #allocation2 [shape = 'u8[4096]{0}', space=vmem, size = 0x1000, scoped, tag = 'input window, operand 0, single buffered']
    #allocation3 [shape = 's32[1]{0}', space=sflag, size = 0x4, scoped, tag = 'scoped memory for tpu_custom_call.1']
    #allocation4 [shape = 's32[1]{0}', space=sflag, size = 0x4, scoped, tag = 'scoped memory for tpu_custom_call.1']
    #allocation5 [shape = 'u8[4096]{0}', space=vmem, size = 0x1000, scoped, tag = 'output window, operand 0, single buffered']
    %12 = vsyncpa [#allocation3], 0
    %13 = vsyncpa [#allocation4], 0
    // Predicated region
    $region2: #{tpu_custom_call.1} parent=1 // pred_check
      _
    $region3: #{tpu_custom_call.1} parent=1 // pred_check_branch
      %15 = sbr.rel (0) target = $region5
    $region4: #{tpu_custom_call.1} parent=1 // pred_region
      %s17 = ssub.s32 128, 128
      %18 = vsyncadd [#allocation3], %s17
      %s20 = sshll.u32 [#allocation2], 4
      %s21 = int_to_ptr.vmem [resolvable:$true] %s20
      %23 = dma.hbm_to_vmem [thread:$0]  %s0, 128, %s21, [#allocation3]
    $region5: #{tpu_custom_call.1} parent=1 // pred_fallthru
      _
    // Predicated region
    $region6: #{tpu_custom_call.1} parent=1 // pred_check
      _
    $region7: #{tpu_custom_call.1} parent=1 // pred_check_branch
      %25 = sbr.rel (0) target = $region9
    $region8: #{tpu_custom_call.1} parent=1 // pred_region
      _
    $region9: #{tpu_custom_call.1} parent=1 // pred_fallthru
      _
    // Predicated region
    $region10: #{tpu_custom_call.1} parent=1 // pred_check
      _
    $region11: #{tpu_custom_call.1} parent=1 // pred_check_branch
      %27 = sbr.rel (0) target = $region13
    $region12: #{tpu_custom_call.1} parent=1 // pred_region
      _
    $region13: #{tpu_custom_call.1} parent=1 // pred_fallthru
      _
    // Predicated region
    $region14: #{tpu_custom_call.1} parent=1 // pred_check
      _
    $region15: #{tpu_custom_call.1} parent=1 // pred_check_branch
      %29 = sbr.rel (0) target = $region17
    $region16: #{tpu_custom_call.1} parent=1 // pred_region
      _
    $region17: #{tpu_custom_call.1} parent=1 // pred_fallthru
      _
    // Predicated region
    $region18: #{tpu_custom_call.1} parent=1 // pred_check
      _
    $region19: #{tpu_custom_call.1} parent=1 // pred_check_branch
      %31 = sbr.rel (0) target = $region21
    $region20: #{tpu_custom_call.1} parent=1 // pred_region
      _
    $region21: #{tpu_custom_call.1} parent=1 // pred_fallthru
      _
    // Predicated region
    $region22: #{tpu_custom_call.1} parent=1 // pred_check
      _
    $region23: #{tpu_custom_call.1} parent=1 // pred_check_branch
      %33 = sbr.rel (0) target = $region25
    $region24: #{tpu_custom_call.1} parent=1 // pred_region
      _
    $region25: #{tpu_custom_call.1} parent=1 // pred_fallthru
      _
    // Predicated region
    $region26: #{tpu_custom_call.1} parent=1 // pred_check
      _
    $region27: #{tpu_custom_call.1} parent=1 // pred_check_branch
      %35 = sbr.rel (0) target = $region29
    $region28: #{tpu_custom_call.1} parent=1 // pred_region
      _
    $region29: #{tpu_custom_call.1} parent=1 // pred_fallthru
      _
    // Predicated region
    $region30: #{tpu_custom_call.1} parent=1 // pred_check
      _
    $region31: #{tpu_custom_call.1} parent=1 // pred_check_branch
      %37 = sbr.rel (0) target = $region33
    $region32: #{tpu_custom_call.1} parent=1 // pred_region
      %38 = dma.done [#allocation3], 128
    $region33: #{tpu_custom_call.1} parent=1 // pred_fallthru
      _
    %v39 = vld [vmem:[#allocation2] sm:$0xff]
    %v40 = vld [vmem:[%s1] sm:$0xff]
    %v41 = vld [vmem:[%s1 + $0x8] sm:$0xff]
    %v42 = vld [vmem:[%s2] sm:$0x1]
    %v44 = vlaneseq
    %v45 = vshrl.u32 %v44, 7
    %v46 = vsub.s32 0, %v45
    %v47 = vrot.slane %v42, %v46
    %vm49 = vcmask 130048
    %v51 = vsel %vm49, %v39, 0
    %53 = vmatprep.subr.mxu0 0.0
    %54 = vmatpush1.msra.mxu0 %v40
    %55 = vmatprep.subr.mxu0 0.0
    %56 = vmatpush1.msra.mxu0 %v41
    %57 = vmatprep.subr.mxu0 0.0
    %58 = vmatpush1.msra.mxu0 0.0
    %59 = vmatprep.subr.mxu0 0.0
    %60 = vmatpush1.msra.mxu0 0.0
    %61 = vmatprep.subr.mxu0 0.0
    %62 = vmatpush1.msra.mxu0 0.0
    %63 = vmatprep.subr.mxu0 0.0
    %64 = vmatpush1.msra.mxu0 0.0
    %65 = vmatprep.subr.mxu0 0.0
    %66 = vmatpush1.msra.mxu0 0.0
    %67 = vmatprep.subr.mxu0 0.0
    %68 = vmatpush1.msra.mxu0 0.0
    %69 = vmatprep.subr.mxu0 0.0
    %70 = vmatpush1.msra.mxu0 0.0
    %71 = vmatprep.subr.mxu0 0.0
    %72 = vmatpush1.msra.mxu0 0.0
    %73 = vmatprep.subr.mxu0 0.0
    %74 = vmatpush1.msra.mxu0 0.0
    %75 = vmatprep.subr.mxu0 0.0
    %76 = vmatpush1.msra.mxu0 0.0
    %77 = vmatprep.subr.mxu0 0.0
    %78 = vmatpush1.msra.mxu0 0.0
    %79 = vmatprep.subr.mxu0 0.0
    %80 = vmatpush1.msra.mxu0 0.0
    %81 = vmatprep.subr.mxu0 0.0
    %82 = vmatpush1.msra.mxu0 0.0
    %83 = vmatprep.subr.mxu0 0.0
    %84 = vmatpush1.msra.mxu0 0.0
    %85 = vmatprep.subr.mxu0 0.0
    %86 = vmatpush1.msra.mxu0 0.0
    %87 = vmatprep.subr.mxu0 0.0
    %88 = vmatpush1.msra.mxu0 0.0
    %89 = vmatprep.subr.mxu0 0.0
    %90 = vmatpush1.msra.mxu0 0.0
    %91 = vmatprep.subr.mxu0 0.0
    %92 = vmatpush1.msra.mxu0 0.0
    %93 = vmatprep.subr.mxu0 0.0
    %94 = vmatpush1.msra.mxu0 0.0
    %95 = vmatprep.subr.mxu0 0.0
    %96 = vmatpush1.msra.mxu0 0.0
    %97 = vmatprep.subr.mxu0 0.0
    %98 = vmatpush1.msra.mxu0 0.0
    %99 = vmatprep.subr.mxu0 0.0
    %100 = vmatpush1.msra.mxu0 0.0
    %101 = vmatprep.subr.mxu0 0.0
    %102 = vmatpush1.msra.mxu0 0.0
    %103 = vmatprep.subr.mxu0 0.0
    %104 = vmatpush1.msra.mxu0 0.0
    %105 = vmatprep.subr.mxu0 0.0
    %106 = vmatpush1.msra.mxu0 0.0
    %107 = vmatprep.subr.mxu0 0.0
    %108 = vmatpush1.msra.mxu0 0.0
    %109 = vmatprep.subr.mxu0 0.0
    %110 = vmatpush1.msra.mxu0 0.0
    %111 = vmatprep.subr.mxu0 0.0
    %112 = vmatpush1.msra.mxu0 0.0
    %113 = vmatprep.subr.mxu0 0.0
    %114 = vmatpush1.msra.mxu0 0.0
    %115 = vmatprep.subr.mxu0 0.0
    %116 = vmatpush1.msra.mxu0 0.0
    %117 = vmatprep.mubr.f32.mxu0 0.0
    %118 = vmatmul.mubr.f32.gmra.mrb[0].mxu0 %v51
    %v119 = vpop.f32.mrb[0].mxu0
    %v120 = vadd.f32 %v47, %v119
    %v121 = vpop.f32.mrb[0].mxu0
    %122 = vdwg.mxu0
    %v123 = vmax.f32 %v120, 0.0
    %v124 = vld [vmem:[%s3] sm:$0xff]
    %v125 = vld [vmem:[%s3 + $0x8] sm:$0xff]
    %v126 = vld [vmem:[%s3 + $0x10] sm:$0xff]
    %v127 = vld [vmem:[%s3 + $0x18] sm:$0xff]
    %v128 = vld [vmem:[%s3 + $0x20] sm:$0xff]
    %v129 = vld [vmem:[%s3 + $0x28] sm:$0xff]
    %v130 = vld [vmem:[%s3 + $0x30] sm:$0xff]
    %v131 = vld [vmem:[%s3 + $0x38] sm:$0xff]
    %v132 = vld [vmem:[%s3 + $0x40] sm:$0xff]
    %v133 = vld [vmem:[%s3 + $0x48] sm:$0xff]
    %v134 = vld [vmem:[%s3 + $0x50] sm:$0xff]
    %v135 = vld [vmem:[%s3 + $0x58] sm:$0xff]
    %v136 = vld [vmem:[%s3 + $0x60] sm:$0xff]
    %v137 = vld [vmem:[%s3 + $0x68] sm:$0xff]
    %v138 = vld [vmem:[%s3 + $0x70] sm:$0xff]
    %v139 = vld [vmem:[%s3 + $0x78] sm:$0xff]
    %v140 = vld [vmem:[%s4] sm:$0x1]
    %v142 = vlaneseq
    %v143 = vshrl.u32 %v142, 7
    %v144 = vsub.s32 0, %v143
    %v145 = vrot.slane %v140, %v144
    %147 = vmatprep.subr.mxu0 0.0
    %148 = vmatpush1.msra.mxu0 %v124
    %149 = vmatprep.subr.mxu0 0.0
    %150 = vmatpush1.msra.mxu0 %v125
    %151 = vmatprep.subr.mxu0 0.0
    %152 = vmatpush1.msra.mxu0 %v126
    %153 = vmatprep.subr.mxu0 0.0
    %154 = vmatpush1.msra.mxu0 %v127
    %155 = vmatprep.subr.mxu0 0.0
    %156 = vmatpush1.msra.mxu0 %v128
    %157 = vmatprep.subr.mxu0 0.0
    %158 = vmatpush1.msra.mxu0 %v129
    %159 = vmatprep.subr.mxu0 0.0
    %160 = vmatpush1.msra.mxu0 %v130
    %161 = vmatprep.subr.mxu0 0.0
    %162 = vmatpush1.msra.mxu0 %v131
    %163 = vmatprep.subr.mxu0 0.0
    %164 = vmatpush1.msra.mxu0 %v132
    %165 = vmatprep.subr.mxu0 0.0
    %166 = vmatpush1.msra.mxu0 %v133
    %167 = vmatprep.subr.mxu0 0.0
    %168 = vmatpush1.msra.mxu0 %v134
    %169 = vmatprep.subr.mxu0 0.0
    %170 = vmatpush1.msra.mxu0 %v135
    %171 = vmatprep.subr.mxu0 0.0
    %172 = vmatpush1.msra.mxu0 %v136
    %173 = vmatprep.subr.mxu0 0.0
    %174 = vmatpush1.msra.mxu0 %v137
    %175 = vmatprep.subr.mxu0 0.0
    %176 = vmatpush1.msra.mxu0 %v138
    %177 = vmatprep.subr.mxu0 0.0
    %178 = vmatpush1.msra.mxu0 %v139
    %179 = vmatprep.subr.mxu0 0.0
    %180 = vmatpush1.msra.mxu0 0.0
    %181 = vmatprep.subr.mxu0 0.0
    %182 = vmatpush1.msra.mxu0 0.0
    %183 = vmatprep.subr.mxu0 0.0
    %184 = vmatpush1.msra.mxu0 0.0
    %185 = vmatprep.subr.mxu0 0.0
    %186 = vmatpush1.msra.mxu0 0.0
    %187 = vmatprep.subr.mxu0 0.0
    %188 = vmatpush1.msra.mxu0 0.0
    %189 = vmatprep.subr.mxu0 0.0
    %190 = vmatpush1.msra.mxu0 0.0
    %191 = vmatprep.subr.mxu0 0.0
    %192 = vmatpush1.msra.mxu0 0.0
    %193 = vmatprep.subr.mxu0 0.0
    %194 = vmatpush1.msra.mxu0 0.0
    %195 = vmatprep.subr.mxu0 0.0
    %196 = vmatpush1.msra.mxu0 0.0
    %197 = vmatprep.subr.mxu0 0.0
    %198 = vmatpush1.msra.mxu0 0.0
    %199 = vmatprep.subr.mxu0 0.0
    %200 = vmatpush1.msra.mxu0 0.0
    %201 = vmatprep.subr.mxu0 0.0
    %202 = vmatpush1.msra.mxu0 0.0
    %203 = vmatprep.subr.mxu0 0.0
    %204 = vmatpush1.msra.mxu0 0.0
    %205 = vmatprep.subr.mxu0 0.0
    %206 = vmatpush1.msra.mxu0 0.0
    %207 = vmatprep.subr.mxu0 0.0
    %208 = vmatpush1.msra.mxu0 0.0
    %209 = vmatprep.subr.mxu0 0.0
    %210 = vmatpush1.msra.mxu0 0.0
    %211 = vmatprep.mubr.f32.mxu0 0.0
    %212 = vmatmul.mubr.f32.gmra.mrb[0].mxu0 %v123
    %v213 = vpop.f32.mrb[0].mxu0
    %v214 = vadd.f32 %v145, %v213
    %v215 = vpop.f32.mrb[0].mxu0
    %216 = vdwg.mxu0
    %v217 = vmax.f32 %v214, 0.0
    %v218 = vld [vmem:[%s5] sm:$0xff]
    %v219 = vld [vmem:[%s5 + $0x8] sm:$0xff]
    %v220 = vld [vmem:[%s5 + $0x10] sm:$0xff]
    %v221 = vld [vmem:[%s5 + $0x18] sm:$0xff]
    %v222 = vld [vmem:[%s5 + $0x20] sm:$0xff]
    %v223 = vld [vmem:[%s5 + $0x28] sm:$0xff]
    %v224 = vld [vmem:[%s5 + $0x30] sm:$0xff]
    %v225 = vld [vmem:[%s5 + $0x38] sm:$0xff]
    %v226 = vld [vmem:[%s5 + $0x40] sm:$0xff]
    %v227 = vld [vmem:[%s5 + $0x48] sm:$0xff]
    %v228 = vld [vmem:[%s5 + $0x50] sm:$0xff]
    %v229 = vld [vmem:[%s5 + $0x58] sm:$0xff]
    %v230 = vld [vmem:[%s5 + $0x60] sm:$0xff]
    %v231 = vld [vmem:[%s5 + $0x68] sm:$0xff]
    %v232 = vld [vmem:[%s5 + $0x70] sm:$0xff]
    %v233 = vld [vmem:[%s5 + $0x78] sm:$0xff]
    %v234 = vld [vmem:[%s6] sm:$0x1]
    %v236 = vlaneseq
    %v237 = vshrl.u32 %v236, 7
    %v238 = vsub.s32 0, %v237
    %v239 = vrot.slane %v234, %v238
    %241 = vmatprep.subr.mxu0 0.0
    %242 = vmatpush1.msra.mxu0 %v218
    %243 = vmatprep.subr.mxu0 0.0
    %244 = vmatpush1.msra.mxu0 %v219
    %245 = vmatprep.subr.mxu0 0.0
    %246 = vmatpush1.msra.mxu0 %v220
    %247 = vmatprep.subr.mxu0 0.0
    %248 = vmatpush1.msra.mxu0 %v221
    %249 = vmatprep.subr.mxu0 0.0
    %250 = vmatpush1.msra.mxu0 %v222
    %251 = vmatprep.subr.mxu0 0.0
    %252 = vmatpush1.msra.mxu0 %v223
    %253 = vmatprep.subr.mxu0 0.0
    %254 = vmatpush1.msra.mxu0 %v224
    %255 = vmatprep.subr.mxu0 0.0
    %256 = vmatpush1.msra.mxu0 %v225
    %257 = vmatprep.subr.mxu0 0.0
    %258 = vmatpush1.msra.mxu0 %v226
    %259 = vmatprep.subr.mxu0 0.0
    %260 = vmatpush1.msra.mxu0 %v227
    %261 = vmatprep.subr.mxu0 0.0
    %262 = vmatpush1.msra.mxu0 %v228
    %263 = vmatprep.subr.mxu0 0.0
    %264 = vmatpush1.msra.mxu0 %v229
    %265 = vmatprep.subr.mxu0 0.0
    %266 = vmatpush1.msra.mxu0 %v230
    %267 = vmatprep.subr.mxu0 0.0
    %268 = vmatpush1.msra.mxu0 %v231
    %269 = vmatprep.subr.mxu0 0.0
    %270 = vmatpush1.msra.mxu0 %v232
    %271 = vmatprep.subr.mxu0 0.0
    %272 = vmatpush1.msra.mxu0 %v233
    %273 = vmatprep.subr.mxu0 0.0
    %274 = vmatpush1.msra.mxu0 0.0
    %275 = vmatprep.subr.mxu0 0.0
    %276 = vmatpush1.msra.mxu0 0.0
    %277 = vmatprep.subr.mxu0 0.0
    %278 = vmatpush1.msra.mxu0 0.0
    %279 = vmatprep.subr.mxu0 0.0
    %280 = vmatpush1.msra.mxu0 0.0
    %281 = vmatprep.subr.mxu0 0.0
    %282 = vmatpush1.msra.mxu0 0.0
    %283 = vmatprep.subr.mxu0 0.0
    %284 = vmatpush1.msra.mxu0 0.0
    %285 = vmatprep.subr.mxu0 0.0
    %286 = vmatpush1.msra.mxu0 0.0
    %287 = vmatprep.subr.mxu0 0.0
    %288 = vmatpush1.msra.mxu0 0.0
    %289 = vmatprep.subr.mxu0 0.0
    %290 = vmatpush1.msra.mxu0 0.0
    %291 = vmatprep.subr.mxu0 0.0
    %292 = vmatpush1.msra.mxu0 0.0
    %293 = vmatprep.subr.mxu0 0.0
    %294 = vmatpush1.msra.mxu0 0.0
    %295 = vmatprep.subr.mxu0 0.0
    %296 = vmatpush1.msra.mxu0 0.0
    %297 = vmatprep.subr.mxu0 0.0
    %298 = vmatpush1.msra.mxu0 0.0
    %299 = vmatprep.subr.mxu0 0.0
    %300 = vmatpush1.msra.mxu0 0.0
    %301 = vmatprep.subr.mxu0 0.0
    %302 = vmatpush1.msra.mxu0 0.0
    %303 = vmatprep.subr.mxu0 0.0
    %304 = vmatpush1.msra.mxu0 0.0
    %305 = vmatprep.mubr.f32.mxu0 0.0
    %306 = vmatmul.mubr.f32.gmra.mrb[0].mxu0 %v217
    %v307 = vpop.f32.mrb[0].mxu0
    %v308 = vadd.f32 %v239, %v307
    %v309 = vpop.f32.mrb[0].mxu0
    %310 = vdwg.mxu0
    %v311 = vtanh.pop %v308
    %vm312 = vcmask 64512
    %313 = vst.msk [vmem:[#allocation5] sm:$0xff] %vm312, %v311
    // Predicated region
    $region34: #{tpu_custom_call.1} parent=1 // pred_check
      _
    $region35: #{tpu_custom_call.1} parent=1 // pred_check_branch
      %315 = sbr.rel (0) target = $region37
    $region36: #{tpu_custom_call.1} parent=1 // pred_region
      %s317 = ssub.s32 128, 128
      %318 = vsyncadd [#allocation4], %s317
      %s320 = sshll.u32 [#allocation5], 4
      %s321 = int_to_ptr.vmem [resolvable:$true] %s320
      %323 = dma.vmem_to_hbm [thread:$0]  %s321, 128, %s7, [#allocation4]
    $region37: #{tpu_custom_call.1} parent=1 // pred_fallthru
      _
    // Predicated region
    $region38: #{tpu_custom_call.1} parent=1 // pred_check
      _
    $region39: #{tpu_custom_call.1} parent=1 // pred_check_branch
      %325 = sbr.rel (0) target = $region41
    $region40: #{tpu_custom_call.1} parent=1 // pred_region
      %326 = dma.done [#allocation4], 128
    $region41: #{tpu_custom_call.1} parent=1 // pred_fallthru
      _
    %327 = vsyncpa [#allocation3], 1
    %328 = vsyncpa [#allocation4], 1

</llo_original>
